<compile_context>
chip_gen: v7x
topology: tpu7x:2x2x1
jax: 0.10.0
libtpu: 0.0.40
codegen_flags: <defaults>
</compile_context>

<pallas_src>
import jax
import jax.numpy as jnp
from jax.experimental import pallas as pl
from jax.experimental.pallas import tpu as pltpu


def _normalize_kernel(scale_ref, bias_ref, x_ref, o_ref):
    # scale_ref / bias_ref : (row_block, 1) f32 VMEM tiles (per-row affine)
    # x_ref / o_ref        : (row_block, col_block) VMEM tiles
    x = x_ref[...].astype(jnp.float32)
    o_ref[...] = (x * scale_ref[...] + bias_ref[...]).astype(o_ref.dtype)


def _cdiv(a, b):
    return -(-a // b)


def _round_up(a, m):
    return _cdiv(a, m) * m


def _sublane_multiple(dtype) -> int:
    # f32 -> 8, bf16/f16 -> 16, int8/uint8/fp8 -> 32 (packed sublanes).
    itemsize = jnp.dtype(dtype).itemsize
    return max(8, 32 // max(1, itemsize))


def _vmem_budget():
    """Generation-gated (block_budget, full_row_stretch, vmem_limit_bytes)."""
    try:
        vmem = int(pltpu.get_tpu_info().vmem_capacity_bytes)
    except Exception:
        vmem = 64 << 20  # conservative: assume v7x per-TC VMEM
    if vmem >= (128 << 20):           # v5e / v6e
        budget = 8 << 20
        vmem_limit = 64 << 20
    else:                              # v7x (64 MiB physical per TC)
        budget = 4 << 20
        vmem_limit = 48 << 20
    # Allow a full-row block to stretch somewhat past `budget` so the DMA stays
    # fully contiguous; 4x stretch must still fit under vmem_limit.
    stretch = max(budget, vmem_limit // 6)
    return budget, stretch, vmem_limit


def _choose_blocks(num_rows, row_elems, itemsize, sub, budget, stretch):
    """Pick (row_block, col_block) respecting the (8,128)/full-dim tiling rule,
    preferring fully contiguous full-row blocks of roughly `budget` bytes."""
    row_bytes = row_elems * itemsize

    if sub * row_bytes <= stretch:
        # Full rows in the lane dim (contiguous HBM DMA per block).
        col_block = row_elems
        if num_rows <= sub:
            row_block = num_rows                        # full sublane extent
        else:
            rb = (budget // row_bytes) // sub * sub
            row_block = int(min(num_rows, max(sub, rb)))
            # Balance the row blocks so grid steps do roughly equal work.
            n_blk = _cdiv(num_rows, row_block)
            row_block = int(min(row_block,
                                _round_up(_cdiv(num_rows, n_blk), sub)))
    else:
        # Rows are huge: tile the lane dim.  Keep per-row segments large and
        # prefer a col_block that divides row_elems (no masked edge block).
        row_block = num_rows if num_rows < sub else sub
        target = (budget // (row_block * itemsize)) // 128 * 128
        target = int(min(row_elems, max(512, target)))
        col_block = target
        d = target - (target % 128)
        while d >= 128:
            if row_elems % d == 0:
                break
            d -= 128
        if d >= 128 and row_elems % d == 0 and d >= max(512, target // 2):
            col_block = d

    return int(row_block), int(col_block)


def normalize(img: jax.Array, mean: jax.Array, std: jax.Array) -> jax.Array:
    """(img - mean[:, None, None]) / std[:, None, None] for NCHW `img`."""
    N, C, H, W = img.shape
    assert mean.shape == (C,) and std.shape == (C,)

    R = N * C
    HW = H * W
    itemsize = jnp.dtype(img.dtype).itemsize
    total_bytes = R * HW * itemsize

    # Per-channel affine, precomputed once (C-length ops): x*scale + bias.
    scale = (1.0 / std).astype(jnp.float32)
    bias = (-mean / std).astype(jnp.float32)
    # Expand to per-(n, c) rows so a flattened block never mixes channels.
    scale_rows = jnp.broadcast_to(scale[None, :], (N, C)).reshape(R, 1)
    bias_rows = jnp.broadcast_to(bias[None, :], (N, C)).reshape(R, 1)

    # Lane-dense view: contiguous trailing-dim reshape, no HBM transpose.
    x2d = img.reshape(R, HW)

    sub = _sublane_multiple(img.dtype)
    budget, stretch, vmem_limit = _vmem_budget()
    row_block, col_block = _choose_blocks(R, HW, itemsize, sub, budget, stretch)

    # Keep >=2 blocks for large-ish inputs so both v7x TensorCores get work
    # (harmless on single-TC v5e/v6e).
    if (_cdiv(R, row_block) * _cdiv(HW, col_block)) == 1 \
            and total_bytes > (2 << 20) and R >= 2 * sub:
        row_block = int(_round_up(_cdiv(R, 2), sub))

    grid = (_cdiv(R, row_block), _cdiv(HW, col_block))

    cost = pl.CostEstimate(
        flops=2 * R * HW,
        transcendentals=0,
        bytes_accessed=2 * total_bytes + 2 * R * 4,
    )

    out2d = pl.pallas_call(
        _normalize_kernel,
        out_shape=jax.ShapeDtypeStruct((R, HW), img.dtype),
        grid=grid,
        in_specs=[
            pl.BlockSpec((row_block, 1), lambda i, j: (i, 0)),          # scale
            pl.BlockSpec((row_block, 1), lambda i, j: (i, 0)),          # bias
            pl.BlockSpec((row_block, col_block), lambda i, j: (i, j)),  # x
        ],
        out_specs=pl.BlockSpec((row_block, col_block), lambda i, j: (i, j)),
        compiler_params=pltpu.CompilerParams(
            dimension_semantics=("parallel", "parallel"),
            vmem_limit_bytes=vmem_limit,
        ),
        cost_estimate=cost,
    )(scale_rows, bias_rows, x2d)

    return out2d.reshape(N, C, H, W)


if __name__ == "__main__":
    key = jax.random.PRNGKey(0)
    k_img, _ = jax.random.split(key)

    # Small shapes consistent with the module: NCHW image, per-channel mean/std.
    N, C, H, W = 2, 3, 16, 16
    img = jax.random.uniform(k_img, (N, C, H, W), dtype=jnp.float32)

    # Deterministic "parameters" (the module's __init__ takes mean/std tensors).
    mean = jnp.array([0.485, 0.456, 0.406], dtype=jnp.float32)
    std = jnp.array([0.229, 0.224, 0.225], dtype=jnp.float32)

    out = normalize(img, mean, std)
    out = jax.block_until_ready(out)

    # Reference check (plain JAX, mirrors PyTorch broadcasting semantics).
    ref = (img - mean[None, :, None, None]) / std[None, :, None, None]
    assert out.shape == img.shape and out.dtype == img.dtype
    # x*scale + bias differs from (x - m)/s by ~1-2 ulp; slightly loosened tol.
    assert jnp.allclose(out, ref, atol=1e-5, rtol=1e-5)

    print("KERNEL_OK")
</pallas_src>

<mosaic_0001>
module attributes {stable_mosaic.version = 11 : i64} {
  func.func @_normalize_kernel(%arg0: i32, %arg1: i32, %arg2: memref<6x1xf32, #tpu.memory_space<vmem>>, %arg3: memref<6x1xf32, #tpu.memory_space<vmem>>, %arg4: memref<6x256xf32, #tpu.memory_space<vmem>>, %arg5: memref<6x256xf32, #tpu.memory_space<vmem>>) attributes {dimension_semantics = [#tpu.dimension_semantics<parallel>, #tpu.dimension_semantics<parallel>], iteration_bounds = array<i64: 1, 1>, scalar_prefetch = 0 : i64, scratch_operands = 0 : i64, tpu.core_type = #tpu.core_type<tc>, window_params = [{transform_indices = @transform_0, window_bounds = array<i64: 6, 1>}, {transform_indices = @transform_1, window_bounds = array<i64: 6, 1>}, {transform_indices = @transform_2, window_bounds = array<i64: 6, 256>}, {transform_indices = @transform_3, window_bounds = array<i64: 6, 256>}]} {
    %c0 = arith.constant 0 : index
    %c0_0 = arith.constant 0 : index
    %0 = vector.load %arg4[%c0, %c0_0] : memref<6x256xf32, #tpu.memory_space<vmem>>, vector<6x256xf32>
    %c0_1 = arith.constant 0 : index
    %c0_2 = arith.constant 0 : index
    %1 = vector.load %arg2[%c0_1, %c0_2] : memref<6x1xf32, #tpu.memory_space<vmem>>, vector<6x1xf32>
    %2 = vector.broadcast %1 : vector<6x1xf32> to vector<6x256xf32>
    %3 = arith.mulf %0, %2 : vector<6x256xf32>
    %c0_3 = arith.constant 0 : index
    %c0_4 = arith.constant 0 : index
    %4 = vector.load %arg3[%c0_3, %c0_4] : memref<6x1xf32, #tpu.memory_space<vmem>>, vector<6x1xf32>
    %5 = vector.broadcast %4 : vector<6x1xf32> to vector<6x256xf32>
    %6 = arith.addf %3, %5 : vector<6x256xf32>
    %c0_5 = arith.constant 0 : index
    %c0_6 = arith.constant 0 : index
    %7 = vector.load %arg5[%c0_5, %c0_6] : memref<6x256xf32, #tpu.memory_space<vmem>>, vector<6x256xf32>
    tpu.vector_store %arg5[%c0_5, %c0_6], %6 {strides = array<i32>} : memref<6x256xf32, #tpu.memory_space<vmem>>, vector<6x256xf32>,
    return
  }
  func.func @transform_0(%arg0: i32, %arg1: i32) -> (i32, i32) {
    %c0_i32 = arith.constant 0 : i32
    %c0_i32_0 = arith.constant 0 : i32
    return %arg0, %c0_i32 : i32, i32
  }
  func.func @transform_1(%arg0: i32, %arg1: i32) -> (i32, i32) {
    %c0_i32 = arith.constant 0 : i32
    %c0_i32_0 = arith.constant 0 : i32
    return %arg0, %c0_i32 : i32, i32
  }
  func.func @transform_2(%arg0: i32, %arg1: i32) -> (i32, i32) {
    %c0_i32 = arith.constant 0 : i32
    return %arg0, %arg1 : i32, i32
  }
  func.func @transform_3(%arg0: i32, %arg1: i32) -> (i32, i32) {
    %c0_i32 = arith.constant 0 : i32
    return %arg0, %arg1 : i32, i32
  }
}

</mosaic_0001>

<llo_original>
// kernel: tpu_custom_call.1
$region0: #{tpu_custom_call.1}
  #allocation0 [shape = 'u32[]', space=smem, size = 0x4, offset = 0x4, fixed_abs, tag = 'smem constant byte address 0x4 - core index']
  #allocation1 [shape = 'u32[144,128]{1,0:T(1,128)}', space=vmem, size = 0x12000, scoped, tag = 'internal scratch']
  %s0 = inlined_call_operand.vmem [shape: f32[6,1], index: 0, kind: input, shape index: {}]
  %s1 = inlined_call_operand.vmem [shape: f32[6,1], index: 1, kind: input, shape index: {}]
  %s2 = inlined_call_operand.vmem [shape: f32[6,256], index: 2, kind: input, shape index: {}]
  %s3 = inlined_call_operand.hbm [shape: f32[6,256], index: 3, kind: output, shape index: {}]
  %s4 = sld [smem:[#allocation0]]
  $region22: #{tpu_custom_call.1} parent=0
    _
  %s6 = ssub.s32 1, %s4
  %s7 = scalar_select 0, %s6, %s4
  $region1: #{tpu_custom_call.1} parent=0
    #allocation2 [shape = 'u8[8192]{0}', space=vmem, size = 0x2000, scoped, tag = 'output window, operand 0, single buffered']
    #allocation3 [shape = 's32[1]{0}', space=sflag, size = 0x4, scoped, tag = 'scoped memory for tpu_custom_call.1']
    %8 = vsyncpa [#allocation3], 0
    // Predicated region
    $region2: #{tpu_custom_call.1} parent=1 // pred_check
      _
    $region3: #{tpu_custom_call.1} parent=1 // pred_check_branch
      %10 = sbr.rel (0) target = $region5
    $region4: #{tpu_custom_call.1} parent=1 // pred_region
      _
    $region5: #{tpu_custom_call.1} parent=1 // pred_fallthru
      _
    // Predicated region
    $region6: #{tpu_custom_call.1} parent=1 // pred_check
      _
    $region7: #{tpu_custom_call.1} parent=1 // pred_check_branch
      %12 = sbr.rel (0) target = $region9
    $region8: #{tpu_custom_call.1} parent=1 // pred_region
      _
    $region9: #{tpu_custom_call.1} parent=1 // pred_fallthru
      _
    // Predicated region
    $region10: #{tpu_custom_call.1} parent=1 // pred_check
      _
    $region11: #{tpu_custom_call.1} parent=1 // pred_check_branch
      %14 = sbr.rel (0) target = $region13
    $region12: #{tpu_custom_call.1} parent=1 // pred_region
      _
    $region13: #{tpu_custom_call.1} parent=1 // pred_fallthru
      _
    %v15 = vld [vmem:[%s2] sm:$0x3f]
    %v16 = vld [vmem:[%s2 + $0x8] sm:$0x3f]
    %v17 = vld [vmem:[%s0] sm:$0x3f]
    %19 = vset.pattern.permute.xlu0 0
    %20 = vperm.xlu0 %19, %v17
    %v21 = vpop.permute.xlu0 %20
    %v23 = vmul.f32 %v15, %v21
    %v24 = vmul.f32 %v16, %v21
    %v25 = vld [vmem:[%s1] sm:$0x3f]
    %27 = vset.pattern.permute.xlu0 0
    %28 = vperm.xlu0 %27, %v25
    %v29 = vpop.permute.xlu0 %28
    %v31 = vadd.f32 %v23, %v29
    %v32 = vadd.f32 %v24, %v29
    %33 = vst [vmem:[#allocation2] sm:$0x3f] %v31
    %34 = vst [vmem:[#allocation2 + $0x8] sm:$0x3f] %v32
    // Predicated region
    $region14: #{tpu_custom_call.1} parent=1 // pred_check
      _
    $region15: #{tpu_custom_call.1} parent=1 // pred_check_branch
      %36 = sbr.rel (0) target = $region17
    $region16: #{tpu_custom_call.1} parent=1 // pred_region
      %s38 = ssub.s32 256, 256
      %39 = vsyncadd [#allocation3], %s38
      %s41 = sshll.u32 [#allocation2], 4
      %s42 = int_to_ptr.vmem [resolvable:$true] %s41
      %44 = dma.vmem_to_hbm [thread:$0]  %s42, 256, %s3, [#allocation3]
    $region17: #{tpu_custom_call.1} parent=1 // pred_fallthru
      _
    // Predicated region
    $region18: #{tpu_custom_call.1} parent=1 // pred_check
      _
    $region19: #{tpu_custom_call.1} parent=1 // pred_check_branch
      %46 = sbr.rel (0) target = $region21
    $region20: #{tpu_custom_call.1} parent=1 // pred_region
      %47 = dma.done [#allocation3], 256
    $region21: #{tpu_custom_call.1} parent=1 // pred_fallthru
      _
    %48 = vsyncpa [#allocation3], 1

</llo_original>
